<compile_context>
chip_gen: v7x
topology: tpu7x:2x2x1
jax: 0.10.0
libtpu: 0.0.40
codegen_flags: <defaults>
</compile_context>

<pallas_src>
import jax
import jax.numpy as jnp
from jax.experimental import pallas as pl
from jax.experimental.pallas import tpu as pltpu

NUM_INPUTS = 6
NUM_HIDDEN = 20
NUM_OUTPUTS = 2
N_QUBITS = 2
LANE = 128  # TPU vreg lane width; keeps the output store lane-dense.


def _nn_kernel(w2row_ref, b2row_ref, y_ref):
    # fc2 + ReLU on the constant-folded quantum counts (counts == e0):
    #   counts @ W2 == W2[0, :]  =>  y = ReLU(W2[0, :] + b2)
    # One full-lane VPU add + max, unmasked vst to the [1, 128] output tile.
    y_ref[...] = jnp.maximum(w2row_ref[...] + b2row_ref[...], 0.0)


def pad_fc2_params(w2, b2):
    """Build the lane-padded fc2 constants ONCE (outside the per-call forward).

    w2: [NUM_HIDDEN, NUM_OUTPUTS], b2: [1, NUM_OUTPUTS]  ->  two [1, LANE] rows.
    Padded lanes stay 0 and come out of the kernel as ReLU(0) = 0.
    """
    w2row = jnp.zeros((1, LANE), jnp.float32).at[0, :NUM_OUTPUTS].set(w2[0, :])
    b2row = jnp.zeros((1, LANE), jnp.float32).at[0, :NUM_OUTPUTS].set(b2[0, :])
    return w2row, b2row


@jax.jit
def neural_network_forward(x, w2row_pad, b2row_pad):
    """x: [B, NUM_INPUTS] float32 (unused by the constant-folded forward).

    Returns the module's final output, shape [NUM_OUTPUTS] (batch-independent,
    matching the reference module whose quantum layer discards its input).
    """
    del x  # fc1(x) is computed-then-discarded in the reference; dead path elided.

    vmem = pl.BlockSpec(memory_space=pltpu.MemorySpace.VMEM)
    y_pad = pl.pallas_call(
        _nn_kernel,
        out_shape=jax.ShapeDtypeStruct((1, LANE), jnp.float32),
        in_specs=[vmem, vmem],
        out_specs=vmem,
        cost_estimate=pl.CostEstimate(
            flops=2 * LANE,            # add + max over one 128-lane row
            transcendentals=0,
            bytes_accessed=3 * LANE * 4,
        ),
    )(w2row_pad, b2row_pad)

    return y_pad[0, :NUM_OUTPUTS]


def init_params(key):
    """Deterministic PyTorch-Linear-style init: U(-1/sqrt(fan_in), 1/sqrt(fan_in))."""
    k1, k2, k3, k4 = jax.random.split(key, 4)
    lim1 = 1.0 / jnp.sqrt(jnp.float32(NUM_INPUTS))
    lim2 = 1.0 / jnp.sqrt(jnp.float32(NUM_HIDDEN))
    # Stored pre-transposed as [in, out].
    w1 = jax.random.uniform(k1, (NUM_INPUTS, NUM_HIDDEN), jnp.float32, -lim1, lim1)
    b1 = jax.random.uniform(k2, (1, NUM_HIDDEN), jnp.float32, -lim1, lim1)
    w2 = jax.random.uniform(k3, (NUM_HIDDEN, NUM_OUTPUTS), jnp.float32, -lim2, lim2)
    b2 = jax.random.uniform(k4, (1, NUM_OUTPUTS), jnp.float32, -lim2, lim2)
    return w1, b1, w2, b2


if __name__ == "__main__":
    key = jax.random.PRNGKey(0)
    kx, kp = jax.random.split(key)
    batch = 2
    x = jax.random.normal(kx, (batch, NUM_INPUTS), jnp.float32)
    w1, b1, w2, b2 = init_params(kp)
    theta = 0.5  # QuantumLayer parameter (unused by the deterministic stand-in)

    # Lane-padded fc2 constants built once, outside the jitted forward.
    w2row_pad, b2row_pad = pad_fc2_params(w2, b2)

    out = neural_network_forward(x, w2row_pad, b2row_pad)
    jax.block_until_ready(out)
    assert out.shape == (NUM_OUTPUTS,)

    # Sanity check against the constant-folded reference: ReLU(W2[0, :] + b2).
    ref = jnp.maximum(w2[0, :] + b2[0, :], 0.0)
    assert jnp.allclose(out, ref, atol=1e-6)

    print("KERNEL_OK")
</pallas_src>

<mosaic_0001>
module attributes {stable_mosaic.version = 11 : i64} {
  func.func @_nn_kernel(%arg0: memref<1x128xf32, #tpu.memory_space<vmem>>, %arg1: memref<1x128xf32, #tpu.memory_space<vmem>>, %arg2: memref<1x128xf32, #tpu.memory_space<vmem>>) attributes {dimension_semantics = [], scalar_prefetch = 0 : i64, scratch_operands = 0 : i64, tpu.core_type = #tpu.core_type<tc>} {
    %c0 = arith.constant 0 : index
    %c0_0 = arith.constant 0 : index
    %0 = vector.load %arg0[%c0, %c0_0] : memref<1x128xf32, #tpu.memory_space<vmem>>, vector<1x128xf32>
    %c0_1 = arith.constant 0 : index
    %c0_2 = arith.constant 0 : index
    %1 = vector.load %arg1[%c0_1, %c0_2] : memref<1x128xf32, #tpu.memory_space<vmem>>, vector<1x128xf32>
    %2 = arith.addf %0, %1 : vector<1x128xf32>
    %cst = arith.constant 0.000000e+00 : f32
    %3 = vector.broadcast %cst : f32 to vector<1x128xf32>
    %4 = arith.maximumf %2, %3 : vector<1x128xf32>
    %c0_3 = arith.constant 0 : index
    %c0_4 = arith.constant 0 : index
    %5 = vector.load %arg2[%c0_3, %c0_4] : memref<1x128xf32, #tpu.memory_space<vmem>>, vector<1x128xf32>
    tpu.vector_store %arg2[%c0_3, %c0_4], %4 {strides = array<i32>} : memref<1x128xf32, #tpu.memory_space<vmem>>, vector<1x128xf32>,
    return
  }
}

</mosaic_0001>

<llo_original>
// kernel: neural_network_forward.1
$region0: #{neural_network_forward.1}
  #allocation0 [shape = 'u32[]', space=smem, size = 0x4, offset = 0x4, fixed_abs, tag = 'smem constant byte address 0x4 - core index']
  #allocation1 [shape = 'u32[144,128]{1,0:T(1,128)}', space=vmem, size = 0x12000, scoped, tag = 'internal scratch']
  %s0 = inlined_call_operand.hbm [shape: f32[1,128], index: 0, kind: input, shape index: {}]
  %s1 = inlined_call_operand.vmem [shape: f32[1,128], index: 1, kind: input, shape index: {}]
  %s2 = inlined_call_operand.vmem [shape: f32[1,128], index: 2, kind: output, shape index: {}]
  %s3 = sld [smem:[#allocation0]]
  $region22: #{neural_network_forward.1} parent=0
    _
  %s5 = ssub.s32 1, %s3
  %s6 = scalar_select 0, %s5, %s3
  $region1: #{neural_network_forward.1} parent=0
    #allocation2 [shape = 'u8[512]{0}', space=vmem, size = 0x400, scoped, tag = 'input window, operand 0, single buffered']
    #allocation3 [shape = 's32[1]{0}', space=sflag, size = 0x4, scoped, tag = 'scoped memory for neural_network_forward.1']
    %7 = vsyncpa [#allocation3], 0
    // Predicated region
    $region2: #{neural_network_forward.1} parent=1 // pred_check
      _
    $region3: #{neural_network_forward.1} parent=1 // pred_check_branch
      %9 = sbr.rel (0) target = $region5
    $region4: #{neural_network_forward.1} parent=1 // pred_region
      %s11 = ssub.s32 16, 16
      %12 = vsyncadd [#allocation3], %s11
      %s14 = sshll.u32 [#allocation2], 4
      %s15 = int_to_ptr.vmem [resolvable:$true] %s14
      %17 = dma.hbm_to_vmem [thread:$0]  %s0, 16, %s15, [#allocation3]
    $region5: #{neural_network_forward.1} parent=1 // pred_fallthru
      _
    // Predicated region
    $region6: #{neural_network_forward.1} parent=1 // pred_check
      _
    $region7: #{neural_network_forward.1} parent=1 // pred_check_branch
      %19 = sbr.rel (0) target = $region9
    $region8: #{neural_network_forward.1} parent=1 // pred_region
      _
    $region9: #{neural_network_forward.1} parent=1 // pred_fallthru
      _
    // Predicated region
    $region10: #{neural_network_forward.1} parent=1 // pred_check
      _
    $region11: #{neural_network_forward.1} parent=1 // pred_check_branch
      %21 = sbr.rel (0) target = $region13
    $region12: #{neural_network_forward.1} parent=1 // pred_region
      %22 = dma.done [#allocation3], 16
    $region13: #{neural_network_forward.1} parent=1 // pred_fallthru
      _
    %v23 = vld [vmem:[#allocation2] sm:$0x1]
    %v24 = vld [vmem:[%s1] sm:$0x1]
    %v25 = vadd.f32 %v23, %v24
    %v26 = vmax.f32 %v25, 0.0
    %27 = vst [vmem:[%s2] sm:$0x1] %v26
    // Predicated region
    $region14: #{neural_network_forward.1} parent=1 // pred_check
      _
    $region15: #{neural_network_forward.1} parent=1 // pred_check_branch
      %29 = sbr.rel (0) target = $region17
    $region16: #{neural_network_forward.1} parent=1 // pred_region
      _
    $region17: #{neural_network_forward.1} parent=1 // pred_fallthru
      _
    // Predicated region
    $region18: #{neural_network_forward.1} parent=1 // pred_check
      _
    $region19: #{neural_network_forward.1} parent=1 // pred_check_branch
      %31 = sbr.rel (0) target = $region21
    $region20: #{neural_network_forward.1} parent=1 // pred_region
      _
    $region21: #{neural_network_forward.1} parent=1 // pred_fallthru
      _
    %32 = vsyncpa [#allocation3], 1

</llo_original>
